<compile_context>
chip_gen: v7x
topology: tpu7x:2x2x1
jax: 0.10.0
libtpu: 0.0.40
codegen_flags: <defaults>
</compile_context>

<pallas_src>
import functools

import jax
import jax.numpy as jnp
from jax import lax
from jax.experimental import pallas as pl
from jax.experimental.pallas import tpu as pltpu


def _round_up(x, m):
    return (x + m - 1) // m * m


def _vmem_budget_bytes():
    """~75% of physical VMEM (96 MiB on v5e/v6e, 48 MiB on v7x)."""
    cap = 64 << 20  # conservative fallback (v7x physical VMEM per TC)
    try:
        info = pltpu.get_tpu_info()
        cap = int(getattr(info, "vmem_capacity_bytes", cap))
    except Exception:
        pass
    return int(cap * 3 // 4)


def _pick_s_chunk(S, tB, max_rows=1024):
    """Largest divisor of S with chunk*tB <= max_rows (bounds f32 temporaries)."""
    best = 1
    for c in range(1, S + 1):
        if S % c == 0 and c * tB <= max_rows:
            best = c
    return best


def _footprint_bytes(tB, S, E2, A, Ddec, in_bytes):
    """Per-grid-step VMEM estimate, including lane/sublane padding."""
    E2p = _round_up(E2, 128)
    Ap = _round_up(A, 128)
    Dp = _round_up(Ddec, 128)
    sc = _pick_s_chunk(S, tB)
    enc_buf = 2 * S * tB * E2p * in_bytes                      # double-buffered encoder tile
    dec_buf = 2 * tB * Dp * in_bytes                           # decoder tile
    w_bufs = 2 * (_round_up(Ddec, 8) + _round_up(E2, 8)) * Ap * in_bytes
    bias_buf = 2 * 8 * Ap * 4
    tmp = 3 * sc * tB * Ap * 4                                 # e_enc + energy + e_dec broadcast
    edec = tB * Ap * 4
    att_scr = _round_up(S, 8) * _round_up(tB, 128) * 4
    out_buf = 2 * tB * _round_up(S, 128) * 4
    return enc_buf + dec_buf + w_bufs + bias_buf + tmp + edec + att_scr + out_buf


def _pick_batch_tile(Bp, S, E2, A, Ddec, in_bytes, budget):
    """Largest multiple-of-8 divisor of Bp that fits the VMEM budget; prefer
    >= 2 grid steps so v7x's 2 TensorCores both get work. Bp % 8 == 0."""
    cands = [d for d in range(8, Bp + 1, 8) if Bp % d == 0]
    fitting = [d for d in cands if _footprint_bytes(d, S, E2, A, Ddec, in_bytes) <= budget]
    split = [d for d in fitting if Bp // d >= 2]
    if split:
        return max(split)
    if fitting:
        return max(fitting)
    return min(cands)  # smallest tile; vmem_limit_bytes is raised anyway


def _attention_kernel(dec_ref, enc_ref, wdec_ref, wenc_ref, bias_ref,
                      out_ref, att_ref, *, s_chunk):
    # dec_ref : [tB, Ddec]           (matmul-input dtype)
    # enc_ref : [S, tB, E2]          (torch [src_len, batch, 2*enc_hid] layout)
    # wdec_ref: [Ddec, A], wenc_ref: [E2, A]  (matmul-input dtype)
    # bias_ref: [1, A] f32
    # out_ref : [tB, S] f32
    # att_ref : [S, tB] f32 VMEM scratch (pre-softmax scores)
    S, tB, E2 = enc_ref.shape
    A = wenc_ref.shape[1]
    n_chunks = S // s_chunk

    # Decoder contribution (shared across src positions); bias folded here once
    # per [tB, A] block instead of being broadcast over [S, tB, A].
    e_dec = jnp.dot(dec_ref[...], wdec_ref[...],
                    preferred_element_type=jnp.float32) + bias_ref[...]      # [tB, A] f32
    # Hoist the broadcast out of the loop (JAX does not CSE broadcast_in_dim).
    e_dec_b = jnp.broadcast_to(e_dec[None, :, :], (s_chunk, tB, A))          # [Sc, tB, A]

    def compute_chunk(c):
        if isinstance(c, int):
            s0 = c * s_chunk
        else:
            s0 = pl.multiple_of(c * s_chunk, s_chunk)
        enc_c = enc_ref[pl.ds(s0, s_chunk), :, :]                            # [Sc, tB, E2]
        # tB % 8 == 0 is guaranteed by the wrapper -> this reshape is a free view.
        e_enc = jnp.dot(enc_c.reshape(s_chunk * tB, E2), wenc_ref[...],
                        preferred_element_type=jnp.float32)                  # [Sc*tB, A] f32
        energy = jnp.tanh(e_enc.reshape(s_chunk, tB, A) + e_dec_b)           # [Sc, tB, A]
        att_ref[pl.ds(s0, s_chunk), :] = jnp.sum(energy, axis=2)             # [Sc, tB]

    if n_chunks == 1:
        compute_chunk(0)
    else:
        def body(c, carry):
            compute_chunk(c)
            return carry
        lax.fori_loop(0, n_chunks, body, 0, unroll=bool(n_chunks <= 8))

    # Softmax over src_len (S is never tiled, so single-pass is exact).
    att = att_ref[...].T                                                     # [tB, S]
    m = jnp.max(att, axis=1, keepdims=True)
    ex = jnp.exp(att - m)
    denom = jnp.sum(ex, axis=1, keepdims=True)
    out_ref[...] = (ex / denom).astype(out_ref.dtype)                        # exact rows-sum-to-1


def attention_pallas(decoder_hidden, encoder_outputs, w, b):
    """decoder_hidden: [B, Ddec]; encoder_outputs: [S, B, 2*Denc] (torch layout);
    w: [A, Ddec + 2*Denc] (torch Linear weight); b: [A].

    The encoder tensor is used in its incoming dtype for the MXU (pass it in
    bf16 upstream for a genuine ~2x HBM saving); accumulation is always f32."""
    S, B, E2 = encoder_outputs.shape
    Ddec = decoder_hidden.shape[1]
    A = w.shape[0]

    in_dtype = encoder_outputs.dtype
    in_bytes = jnp.dtype(in_dtype).itemsize

    # torch Linear: y = x @ W.T + b ; concat order was (dec_hidden, enc_outputs).
    w_dec = jnp.transpose(w[:, :Ddec]).astype(in_dtype)    # [Ddec, A]
    w_enc = jnp.transpose(w[:, Ddec:]).astype(in_dtype)    # [E2, A]
    bias = b.reshape(1, A).astype(jnp.float32)
    dec = decoder_hidden.astype(in_dtype)

    # Pad batch to a multiple of 8 so the batch tile is always 8-aligned
    # (keeps the in-kernel reshape a zero-cost view). Only tiny batches pad.
    Bp = _round_up(B, 8)
    enc = encoder_outputs
    if Bp != B:
        dec = jnp.pad(dec, ((0, Bp - B), (0, 0)))
        enc = jnp.pad(enc, ((0, 0), (0, Bp - B), (0, 0)))

    budget = _vmem_budget_bytes()
    tB = _pick_batch_tile(Bp, S, E2, A, Ddec, in_bytes, budget)
    s_chunk = _pick_s_chunk(S, tB)
    grid = (Bp // tB,)

    # TODO(synk): if S ever needs tiling (very long sources), the softmax must
    # become two-pass/online; S is kept whole here so single-pass is exact.

    cost = pl.CostEstimate(
        flops=int(2 * S * Bp * E2 * A + 2 * Bp * Ddec * A + S * Bp * A),
        transcendentals=int(S * Bp * A + Bp * S),
        bytes_accessed=int(S * Bp * E2 * in_bytes + Bp * Ddec * in_bytes
                           + (Ddec + E2) * A * in_bytes + A * 4 + Bp * S * 4),
    )

    grid_spec = pltpu.PrefetchScalarGridSpec(
        num_scalar_prefetch=0,
        grid=grid,
        in_specs=[
            pl.BlockSpec((tB, Ddec), lambda i: (i, 0)),       # decoder tile
            pl.BlockSpec((S, tB, E2), lambda i: (0, i, 0)),   # encoder tile, torch layout
            pl.BlockSpec((Ddec, A), lambda i: (0, 0)),        # resident weights
            pl.BlockSpec((E2, A), lambda i: (0, 0)),
            pl.BlockSpec((1, A), lambda i: (0, 0)),           # resident bias
        ],
        out_specs=pl.BlockSpec((tB, S), lambda i: (i, 0)),
        scratch_shapes=[pltpu.VMEM((S, tB), jnp.float32)],    # pre-softmax scores
    )

    out = pl.pallas_call(
        functools.partial(_attention_kernel, s_chunk=s_chunk),
        out_shape=jax.ShapeDtypeStruct((Bp, S), jnp.float32),
        grid_spec=grid_spec,
        compiler_params=pltpu.CompilerParams(
            dimension_semantics=("parallel",),
            vmem_limit_bytes=int(budget),
        ),
        cost_estimate=cost,
    )(dec, enc, w_dec, w_enc, bias)

    return out[:B] if Bp != B else out


def attention_reference(decoder_hidden, encoder_outputs, w, b):
    """Pure-JAX reference matching the PyTorch forward exactly."""
    S = encoder_outputs.shape[0]
    rep = jnp.repeat(decoder_hidden[:, None, :], S, axis=1)          # [B, S, Ddec]
    enc = jnp.transpose(encoder_outputs, (1, 0, 2))                  # [B, S, 2*Denc]
    x = jnp.concatenate([rep, enc], axis=2)                          # [B, S, attn_in]
    energy = jnp.tanh(jnp.einsum("bsi,ai->bsa", x, w) + b)           # [B, S, A]
    att = jnp.sum(energy, axis=2)                                    # [B, S]
    return jax.nn.softmax(att, axis=1)


if __name__ == "__main__":
    # Small, module-consistent shapes.
    enc_hid_dim, dec_hid_dim, attn_dim = 16, 32, 32
    batch, src_len = 2, 8
    attn_in = enc_hid_dim * 2 + dec_hid_dim

    key = jax.random.PRNGKey(0)
    k1, k2, k3, k4 = jax.random.split(key, 4)

    decoder_hidden = jax.random.normal(k1, (batch, dec_hid_dim), dtype=jnp.float32)
    encoder_outputs = jax.random.normal(k2, (src_len, batch, enc_hid_dim * 2),
                                        dtype=jnp.float32)
    # Deterministic Linear params (torch conventions: W [A, attn_in], b [A]).
    bound = 1.0 / (attn_in ** 0.5)
    w = jax.random.uniform(k3, (attn_dim, attn_in), minval=-bound, maxval=bound,
                           dtype=jnp.float32)
    b = jax.random.uniform(k4, (attn_dim,), minval=-bound, maxval=bound,
                           dtype=jnp.float32)

    out = attention_pallas(decoder_hidden, encoder_outputs, w, b)
    out = jax.block_until_ready(out)

    ref = attention_reference(decoder_hidden, encoder_outputs, w, b)
    assert out.shape == (batch, src_len)
    assert jnp.allclose(out, ref, atol=1e-3, rtol=1e-3), "mismatch vs reference"

    print("KERNEL_OK")
</pallas_src>

<mosaic_0001>
module attributes {stable_mosaic.version = 11 : i64} {
  func.func @_attention_kernel(%arg0: i32, %arg1: memref<8x32xf32, #tpu.memory_space<vmem>>, %arg2: memref<8x8x32xf32, #tpu.memory_space<vmem>>, %arg3: memref<32x32xf32, #tpu.memory_space<vmem>>, %arg4: memref<32x32xf32, #tpu.memory_space<vmem>>, %arg5: memref<1x32xf32, #tpu.memory_space<vmem>>, %arg6: memref<8x8xf32, #tpu.memory_space<vmem>>, %arg7: memref<8x8xf32, #tpu.memory_space<vmem>>) attributes {dimension_semantics = [#tpu.dimension_semantics<parallel>], iteration_bounds = array<i64: 1>, scalar_prefetch = 0 : i64, scratch_operands = 1 : i64, tpu.core_type = #tpu.core_type<tc>, window_params = [{transform_indices = @transform_0, window_bounds = array<i64: 8, 32>}, {transform_indices = @transform_1, window_bounds = array<i64: 8, 8, 32>}, {pipeline_mode = #tpu.pipeline_mode<synchronous>, transform_indices = @transform_2, window_bounds = array<i64: 32, 32>}, {pipeline_mode = #tpu.pipeline_mode<synchronous>, transform_indices = @transform_3, window_bounds = array<i64: 32, 32>}, {pipeline_mode = #tpu.pipeline_mode<synchronous>, transform_indices = @transform_4, window_bounds = array<i64: 1, 32>}, {transform_indices = @transform_5, window_bounds = array<i64: 8, 8>}]} {
    %c0 = arith.constant 0 : index
    %c0_0 = arith.constant 0 : index
    %0 = vector.load %arg1[%c0, %c0_0] : memref<8x32xf32, #tpu.memory_space<vmem>>, vector<8x32xf32>
    %c0_1 = arith.constant 0 : index
    %c0_2 = arith.constant 0 : index
    %1 = vector.load %arg3[%c0_1, %c0_2] : memref<32x32xf32, #tpu.memory_space<vmem>>, vector<32x32xf32>
    %cst = arith.constant dense<0.000000e+00> : vector<8x32xf32>
    %2 = tpu.matmul %0, %1, %cst {dimension_numbers = #tpu.dot_dimension_numbers<[1], [0], [0], [1], [0, 0, 1, 1], [], []>} : vector<8x32xf32>, vector<32x32xf32>, vector<8x32xf32> -> vector<8x32xf32>
    %c0_3 = arith.constant 0 : index
    %c0_4 = arith.constant 0 : index
    %3 = vector.load %arg5[%c0_3, %c0_4] : memref<1x32xf32, #tpu.memory_space<vmem>>, vector<1x32xf32>
    %4 = vector.broadcast %3 : vector<1x32xf32> to vector<8x32xf32>
    %5 = arith.addf %2, %4 : vector<8x32xf32>
    %6 = vector.shape_cast %5 : vector<8x32xf32> to vector<1x8x32xf32>
    %7 = vector.shape_cast %6 : vector<1x8x32xf32> to vector<1x8x32xf32>
    %8 = vector.broadcast %7 : vector<1x8x32xf32> to vector<8x8x32xf32>
    %c0_5 = arith.constant 0 : index
    %c0_6 = arith.constant 0 : index
    %c0_7 = arith.constant 0 : index
    %9 = vector.load %arg2[%c0_5, %c0_6, %c0_7] : memref<8x8x32xf32, #tpu.memory_space<vmem>>, vector<8x8x32xf32>
    %10 = vector.shape_cast %9 : vector<8x8x32xf32> to vector<64x32xf32>
    %c0_8 = arith.constant 0 : index
    %c0_9 = arith.constant 0 : index
    %11 = vector.load %arg4[%c0_8, %c0_9] : memref<32x32xf32, #tpu.memory_space<vmem>>, vector<32x32xf32>
    %cst_10 = arith.constant dense<0.000000e+00> : vector<64x32xf32>
    %12 = tpu.matmul %10, %11, %cst_10 {dimension_numbers = #tpu.dot_dimension_numbers<[1], [0], [0], [1], [0, 0, 1, 1], [], []>} : vector<64x32xf32>, vector<32x32xf32>, vector<64x32xf32> -> vector<64x32xf32>
    %13 = vector.shape_cast %12 : vector<64x32xf32> to vector<8x8x32xf32>
    %14 = arith.addf %13, %8 : vector<8x8x32xf32>
    %15 = math.tanh %14 : vector<8x8x32xf32>
    %cst_11 = arith.constant dense<0.000000e+00> : vector<8x8xf32>
    %16 = vector.multi_reduction <add>, %15, %cst_11 [2] : vector<8x8x32xf32> to vector<8x8xf32>
    %c0_12 = arith.constant 0 : index
    %c0_13 = arith.constant 0 : index
    %17 = vector.load %arg7[%c0_12, %c0_13] : memref<8x8xf32, #tpu.memory_space<vmem>>, vector<8x8xf32>
    tpu.vector_store %arg7[%c0_12, %c0_13], %16 {strides = array<i32>} : memref<8x8xf32, #tpu.memory_space<vmem>>, vector<8x8xf32>,
    %c0_14 = arith.constant 0 : index
    %c0_15 = arith.constant 0 : index
    %18 = vector.load %arg7[%c0_14, %c0_15] : memref<8x8xf32, #tpu.memory_space<vmem>>, vector<8x8xf32>
    %19 = tpu.transpose %18, [1, 0] : vector<8x8xf32> -> vector<8x8xf32>
    %cst_16 = arith.constant dense<0xFF800000> : vector<8xf32>
    %20 = vector.multi_reduction <maximumf>, %19, %cst_16 [1] : vector<8x8xf32> to vector<8xf32>
    %21 = vector.shape_cast %20 : vector<8xf32> to vector<8x1xf32>
    %22 = vector.broadcast %21 : vector<8x1xf32> to vector<8x8xf32>
    %23 = arith.subf %19, %22 : vector<8x8xf32>
    %24 = math.exp %23 : vector<8x8xf32>
    %cst_17 = arith.constant dense<0.000000e+00> : vector<8xf32>
    %25 = vector.multi_reduction <add>, %24, %cst_17 [1] : vector<8x8xf32> to vector<8xf32>
    %26 = vector.shape_cast %25 : vector<8xf32> to vector<8x1xf32>
    %27 = vector.broadcast %26 : vector<8x1xf32> to vector<8x8xf32>
    %28 = arith.divf %24, %27 : vector<8x8xf32>
    %c0_18 = arith.constant 0 : index
    %c0_19 = arith.constant 0 : index
    %29 = vector.load %arg6[%c0_18, %c0_19] : memref<8x8xf32, #tpu.memory_space<vmem>>, vector<8x8xf32>
    tpu.vector_store %arg6[%c0_18, %c0_19], %28 {strides = array<i32>} : memref<8x8xf32, #tpu.memory_space<vmem>>, vector<8x8xf32>,
    return
  }
  func.func @transform_0(%arg0: i32) -> (i32, i32) {
    %c0_i32 = arith.constant 0 : i32
    %c0_i32_0 = arith.constant 0 : i32
    return %arg0, %c0_i32 : i32, i32
  }
  func.func @transform_1(%arg0: i32) -> (i32, i32, i32) {
    %c0_i32 = arith.constant 0 : i32
    %c0_i32_0 = arith.constant 0 : i32
    %c0_i32_1 = arith.constant 0 : i32
    return %c0_i32, %arg0, %c0_i32_0 : i32, i32, i32
  }
  func.func @transform_2(%arg0: i32) -> (i32, i32) {
    %c0_i32 = arith.constant 0 : i32
    %c0_i32_0 = arith.constant 0 : i32
    %c0_i32_1 = arith.constant 0 : i32
    return %c0_i32, %c0_i32_0 : i32, i32
  }
  func.func @transform_3(%arg0: i32) -> (i32, i32) {
    %c0_i32 = arith.constant 0 : i32
    %c0_i32_0 = arith.constant 0 : i32
    %c0_i32_1 = arith.constant 0 : i32
    return %c0_i32, %c0_i32_0 : i32, i32
  }
  func.func @transform_4(%arg0: i32) -> (i32, i32) {
    %c0_i32 = arith.constant 0 : i32
    %c0_i32_0 = arith.constant 0 : i32
    %c0_i32_1 = arith.constant 0 : i32
    return %c0_i32, %c0_i32_0 : i32, i32
  }
  func.func @transform_5(%arg0: i32) -> (i32, i32) {
    %c0_i32 = arith.constant 0 : i32
    %c0_i32_0 = arith.constant 0 : i32
    return %arg0, %c0_i32 : i32, i32
  }
}

</mosaic_0001>

<llo_original>
// kernel: tpu_custom_call.1
$region0: #{tpu_custom_call.1}
  #allocation0 [shape = 'u32[]', space=smem, size = 0x4, offset = 0x4, fixed_abs, tag = 'smem constant byte address 0x4 - core index']
  #allocation1 [shape = 'u32[144,128]{1,0:T(1,128)}', space=vmem, size = 0x12000, scoped, tag = 'internal scratch']
  #allocation2 [shape = 'f32[8,8]{1,0:T(8,128)}', space=vmem, size = 0x1000, scoped, tag = 'scratch operand']
  %s0 = inlined_call_operand.hbm [shape: f32[8,32], index: 0, kind: input, shape index: {}]
  %s1 = inlined_call_operand.hbm [shape: f32[8,8,32], index: 1, kind: input, shape index: {}]
  %s2 = inlined_call_operand.hbm [shape: f32[32,32], index: 2, kind: input, shape index: {}]
  %s3 = inlined_call_operand.hbm [shape: f32[32,32], index: 3, kind: input, shape index: {}]
  %s4 = inlined_call_operand.vmem [shape: f32[1,32], index: 4, kind: input, shape index: {}]
  %s5 = inlined_call_operand.hbm [shape: f32[8,8], index: 5, kind: output, shape index: {}]
  %s6 = sld [smem:[#allocation0]]
  $region46: #{tpu_custom_call.1} parent=0
    _
  %s8 = ssub.s32 1, %s6
  %s9 = scalar_select 0, %s8, %s6
  $region1: #{tpu_custom_call.1} parent=0
    #allocation3 [shape = 'u8[4096]{0}', space=vmem, size = 0x1000, scoped, tag = 'input window, operand 0, single buffered']
    #allocation4 [shape = 's32[1]{0}', space=sflag, size = 0x4, scoped, tag = 'scoped memory for tpu_custom_call.1']
    #allocation5 [shape = 's32[1]{0}', space=sflag, size = 0x4, scoped, tag = 'scoped memory for tpu_custom_call.1']
    #allocation6 [shape = 'u8[32768]{0}', space=vmem, size = 0x8000, scoped, tag = 'input window, operand 1, single buffered']
    #allocation7 [shape = 's32[1]{0}', space=sflag, size = 0x4, scoped, tag = 'scoped memory for tpu_custom_call.1']
    #allocation8 [shape = 'u8[16384]{0}', space=vmem, size = 0x4000, scoped, tag = 'input window, operand 2, single buffered']
    #allocation9 [shape = 'u8[16384]{0}', space=vmem, size = 0x4000, scoped, tag = 'input window, operand 3, single buffered']
    #allocation10 [shape = 's32[1]{0}', space=sflag, size = 0x4, scoped, tag = 'scoped memory for tpu_custom_call.1']
    #allocation11 [shape = 'u8[4096]{0}', space=vmem, size = 0x1000, scoped, tag = 'output window, operand 0, single buffered']
    %10 = vsyncpa [#allocation4], 0
    %11 = vsyncpa [#allocation7], 0
    %12 = vsyncpa [#allocation10], 0
    %13 = vsyncpa [#allocation5], 0
    // Predicated region
    $region2: #{tpu_custom_call.1} parent=1 // pred_check
      _
    $region3: #{tpu_custom_call.1} parent=1 // pred_check_branch
      %15 = sbr.rel (0) target = $region5
    $region4: #{tpu_custom_call.1} parent=1 // pred_region
      %s17 = ssub.s32 128, 128
      %18 = vsyncadd [#allocation4], %s17
      %s20 = sshll.u32 [#allocation3], 4
      %s21 = int_to_ptr.vmem [resolvable:$true] %s20
      %23 = dma.hbm_to_vmem [thread:$0]  %s0, 128, %s21, [#allocation4]
    $region5: #{tpu_custom_call.1} parent=1 // pred_fallthru
      _
    // Predicated region
    $region6: #{tpu_custom_call.1} parent=1 // pred_check
      _
    $region7: #{tpu_custom_call.1} parent=1 // pred_check_branch
      %25 = sbr.rel (0) target = $region9
    $region8: #{tpu_custom_call.1} parent=1 // pred_region
      %s27 = ssub.s32 1024, 1024
      %28 = vsyncadd [#allocation7], %s27
      %s29 = sshll.u32 [#allocation6], 4
      %s30 = int_to_ptr.vmem [resolvable:$true] %s29
      %35 = dma.hbm_to_vmem [thread:$0]  %s1, 1024, %s30, [#allocation7], 128, 128, 8
    $region9: #{tpu_custom_call.1} parent=1 // pred_fallthru
      _
    // Predicated region
    $region10: #{tpu_custom_call.1} parent=1 // pred_check
      _
    $region11: #{tpu_custom_call.1} parent=1 // pred_check_branch
      %37 = sbr.rel (0) target = $region13
    $region12: #{tpu_custom_call.1} parent=1 // pred_region
      %s39 = ssub.s32 512, 512
      %40 = vsyncadd [#allocation7], %s39
      %s41 = sshll.u32 [#allocation8], 4
      %s42 = int_to_ptr.vmem [resolvable:$true] %s41
      %47 = dma.hbm_to_vmem [thread:$0]  %s2, 512, %s42, [#allocation7], 128, 128, 8
    $region13: #{tpu_custom_call.1} parent=1 // pred_fallthru
      _
    // Predicated region
    $region14: #{tpu_custom_call.1} parent=1 // pred_check
      _
    $region15: #{tpu_custom_call.1} parent=1 // pred_check_branch
      %49 = sbr.rel (0) target = $region17
    $region16: #{tpu_custom_call.1} parent=1 // pred_region
      %s51 = ssub.s32 512, 512
      %52 = vsyncadd [#allocation10], %s51
      %s53 = sshll.u32 [#allocation9], 4
      %s54 = int_to_ptr.vmem [resolvable:$true] %s53
      %59 = dma.hbm_to_vmem [thread:$0]  %s3, 512, %s54, [#allocation10], 128, 128, 8
    $region17: #{tpu_custom_call.1} parent=1 // pred_fallthru
      _
    // Predicated region
    $region18: #{tpu_custom_call.1} parent=1 // pred_check
      _
    $region19: #{tpu_custom_call.1} parent=1 // pred_check_branch
      %61 = sbr.rel (0) target = $region21
    $region20: #{tpu_custom_call.1} parent=1 // pred_region
      _
    $region21: #{tpu_custom_call.1} parent=1 // pred_fallthru
      _
    // Predicated region
    $region22: #{tpu_custom_call.1} parent=1 // pred_check
      _
    $region23: #{tpu_custom_call.1} parent=1 // pred_check_branch
      %63 = sbr.rel (0) target = $region25
    $region24: #{tpu_custom_call.1} parent=1 // pred_region
      %64 = dma.done [#allocation4], 128
    $region25: #{tpu_custom_call.1} parent=1 // pred_fallthru
      _
    // Predicated region
    $region26: #{tpu_custom_call.1} parent=1 // pred_check
      _
    $region27: #{tpu_custom_call.1} parent=1 // pred_check_branch
      %66 = sbr.rel (0) target = $region29
    $region28: #{tpu_custom_call.1} parent=1 // pred_region
      %67 = dma.done [#allocation7], 1024
    $region29: #{tpu_custom_call.1} parent=1 // pred_fallthru
      _
    // Predicated region
    $region30: #{tpu_custom_call.1} parent=1 // pred_check
      _
    $region31: #{tpu_custom_call.1} parent=1 // pred_check_branch
      %69 = sbr.rel (0) target = $region33
    $region32: #{tpu_custom_call.1} parent=1 // pred_region
      %70 = dma.done [#allocation7], 512
    $region33: #{tpu_custom_call.1} parent=1 // pred_fallthru
      _
    // Predicated region
    $region34: #{tpu_custom_call.1} parent=1 // pred_check
      _
    $region35: #{tpu_custom_call.1} parent=1 // pred_check_branch
      %72 = sbr.rel (0) target = $region37
    $region36: #{tpu_custom_call.1} parent=1 // pred_region
      %73 = dma.done [#allocation10], 512
    $region37: #{tpu_custom_call.1} parent=1 // pred_fallthru
      _
    %v74 = vld [vmem:[#allocation3] sm:$0xff]
    %v75 = vld [vmem:[#allocation8] sm:$0xff]
    %v76 = vld [vmem:[#allocation8 + $0x8] sm:$0xff]
    %v77 = vld [vmem:[#allocation8 + $0x10] sm:$0xff]
    %v78 = vld [vmem:[#allocation8 + $0x18] sm:$0xff]
    %v79 = vld [vmem:[%s4] sm:$0x1]
    %v81 = vlaneseq
    %v82 = vshrl.u32 %v81, 7
    %v83 = vsub.s32 0, %v82
    %v84 = vrot.slane %v79, %v83
    %vm86 = vcmask 261120
    %v88 = vsel %vm86, %v74, 0
    %90 = vmatprep.subr.mxu0 0.0
    %91 = vmatpush1.msra.mxu0 %v75
    %92 = vmatprep.subr.mxu0 0.0
    %93 = vmatpush1.msra.mxu0 %v76
    %94 = vmatprep.subr.mxu0 0.0
    %95 = vmatpush1.msra.mxu0 %v77
    %96 = vmatprep.subr.mxu0 0.0
    %97 = vmatpush1.msra.mxu0 %v78
    %98 = vmatprep.subr.mxu0 0.0
    %99 = vmatpush1.msra.mxu0 0.0
    %100 = vmatprep.subr.mxu0 0.0
    %101 = vmatpush1.msra.mxu0 0.0
    %102 = vmatprep.subr.mxu0 0.0
    %103 = vmatpush1.msra.mxu0 0.0
    %104 = vmatprep.subr.mxu0 0.0
    %105 = vmatpush1.msra.mxu0 0.0
    %106 = vmatprep.subr.mxu0 0.0
    %107 = vmatpush1.msra.mxu0 0.0
    %108 = vmatprep.subr.mxu0 0.0
    %109 = vmatpush1.msra.mxu0 0.0
    %110 = vmatprep.subr.mxu0 0.0
    %111 = vmatpush1.msra.mxu0 0.0
    %112 = vmatprep.subr.mxu0 0.0
    %113 = vmatpush1.msra.mxu0 0.0
    %114 = vmatprep.subr.mxu0 0.0
    %115 = vmatpush1.msra.mxu0 0.0
    %116 = vmatprep.subr.mxu0 0.0
    %117 = vmatpush1.msra.mxu0 0.0
    %118 = vmatprep.subr.mxu0 0.0
    %119 = vmatpush1.msra.mxu0 0.0
    %120 = vmatprep.subr.mxu0 0.0
    %121 = vmatpush1.msra.mxu0 0.0
    %122 = vmatprep.subr.mxu0 0.0
    %123 = vmatpush1.msra.mxu0 0.0
    %124 = vmatprep.subr.mxu0 0.0
    %125 = vmatpush1.msra.mxu0 0.0
    %126 = vmatprep.subr.mxu0 0.0
    %127 = vmatpush1.msra.mxu0 0.0
    %128 = vmatprep.subr.mxu0 0.0
    %129 = vmatpush1.msra.mxu0 0.0
    %130 = vmatprep.subr.mxu0 0.0
    %131 = vmatpush1.msra.mxu0 0.0
    %132 = vmatprep.subr.mxu0 0.0
    %133 = vmatpush1.msra.mxu0 0.0
    %134 = vmatprep.subr.mxu0 0.0
    %135 = vmatpush1.msra.mxu0 0.0
    %136 = vmatprep.subr.mxu0 0.0
    %137 = vmatpush1.msra.mxu0 0.0
    %138 = vmatprep.subr.mxu0 0.0
    %139 = vmatpush1.msra.mxu0 0.0
    %140 = vmatprep.subr.mxu0 0.0
    %141 = vmatpush1.msra.mxu0 0.0
    %142 = vmatprep.subr.mxu0 0.0
    %143 = vmatpush1.msra.mxu0 0.0
    %144 = vmatprep.subr.mxu0 0.0
    %145 = vmatpush1.msra.mxu0 0.0
    %146 = vmatprep.subr.mxu0 0.0
    %147 = vmatpush1.msra.mxu0 0.0
    %148 = vmatprep.subr.mxu0 0.0
    %149 = vmatpush1.msra.mxu0 0.0
    %150 = vmatprep.subr.mxu0 0.0
    %151 = vmatpush1.msra.mxu0 0.0
    %152 = vmatprep.subr.mxu0 0.0
    %153 = vmatpush1.msra.mxu0 0.0
    %154 = vmatprep.mubr.f32.mxu0 0.0
    %155 = vmatmul.mubr.f32.gmra.mrb[0].mxu0 %v88
    %v156 = vpop.f32.mrb[0].mxu0
    %v157 = vadd.f32 %v84, %v156
    %v158 = vpop.f32.mrb[0].mxu0
    %159 = vdwg.mxu0
    %v160 = vld [vmem:[#allocation6] sm:$0xff]
    %v161 = vld [vmem:[#allocation6 + $0x8] sm:$0xff]
    %v162 = vld [vmem:[#allocation6 + $0x10] sm:$0xff]
    %v163 = vld [vmem:[#allocation6 + $0x18] sm:$0xff]
    %v164 = vld [vmem:[#allocation6 + $0x20] sm:$0xff]
    %v165 = vld [vmem:[#allocation6 + $0x28] sm:$0xff]
    %v166 = vld [vmem:[#allocation6 + $0x30] sm:$0xff]
    %v167 = vld [vmem:[#allocation6 + $0x38] sm:$0xff]
    %v168 = vld [vmem:[#allocation9] sm:$0xff]
    %v169 = vld [vmem:[#allocation9 + $0x8] sm:$0xff]
    %v170 = vld [vmem:[#allocation9 + $0x10] sm:$0xff]
    %v171 = vld [vmem:[#allocation9 + $0x18] sm:$0xff]
    %v173 = vsel %vm86, %v160, 0
    %v176 = vsel %vm86, %v161, 0
    %v179 = vsel %vm86, %v162, 0
    %v182 = vsel %vm86, %v163, 0
    %v185 = vsel %vm86, %v164, 0
    %v188 = vsel %vm86, %v165, 0
    %v191 = vsel %vm86, %v166, 0
    %v194 = vsel %vm86, %v167, 0
    %196 = vmatprep.subr.mxu0 0.0
    %197 = vmatpush1.msra.mxu0 %v168
    %198 = vmatprep.subr.mxu0 0.0
    %199 = vmatpush1.msra.mxu0 %v169
    %200 = vmatprep.subr.mxu0 0.0
    %201 = vmatpush1.msra.mxu0 %v170
    %202 = vmatprep.subr.mxu0 0.0
    %203 = vmatpush1.msra.mxu0 %v171
    %204 = vmatprep.subr.mxu0 0.0
    %205 = vmatpush1.msra.mxu0 0.0
    %206 = vmatprep.subr.mxu0 0.0
    %207 = vmatpush1.msra.mxu0 0.0
    %208 = vmatprep.subr.mxu0 0.0
    %209 = vmatpush1.msra.mxu0 0.0
    %210 = vmatprep.subr.mxu0 0.0
    %211 = vmatpush1.msra.mxu0 0.0
    %212 = vmatprep.subr.mxu0 0.0
    %213 = vmatpush1.msra.mxu0 0.0
    %214 = vmatprep.subr.mxu0 0.0
    %215 = vmatpush1.msra.mxu0 0.0
    %216 = vmatprep.subr.mxu0 0.0
    %217 = vmatpush1.msra.mxu0 0.0
    %218 = vmatprep.subr.mxu0 0.0
    %219 = vmatpush1.msra.mxu0 0.0
    %220 = vmatprep.subr.mxu0 0.0
    %221 = vmatpush1.msra.mxu0 0.0
    %222 = vmatprep.subr.mxu0 0.0
    %223 = vmatpush1.msra.mxu0 0.0
    %224 = vmatprep.subr.mxu0 0.0
    %225 = vmatpush1.msra.mxu0 0.0
    %226 = vmatprep.subr.mxu0 0.0
    %227 = vmatpush1.msra.mxu0 0.0
    %228 = vmatprep.subr.mxu0 0.0
    %229 = vmatpush1.msra.mxu0 0.0
    %230 = vmatprep.subr.mxu0 0.0
    %231 = vmatpush1.msra.mxu0 0.0
    %232 = vmatprep.subr.mxu0 0.0
    %233 = vmatpush1.msra.mxu0 0.0
    %234 = vmatprep.subr.mxu0 0.0
    %235 = vmatpush1.msra.mxu0 0.0
    %236 = vmatprep.subr.mxu0 0.0
    %237 = vmatpush1.msra.mxu0 0.0
    %238 = vmatprep.subr.mxu0 0.0
    %239 = vmatpush1.msra.mxu0 0.0
    %240 = vmatprep.subr.mxu0 0.0
    %241 = vmatpush1.msra.mxu0 0.0
    %242 = vmatprep.subr.mxu0 0.0
    %243 = vmatpush1.msra.mxu0 0.0
    %244 = vmatprep.subr.mxu0 0.0
    %245 = vmatpush1.msra.mxu0 0.0
    %246 = vmatprep.subr.mxu0 0.0
    %247 = vmatpush1.msra.mxu0 0.0
    %248 = vmatprep.subr.mxu0 0.0
    %249 = vmatpush1.msra.mxu0 0.0
    %250 = vmatprep.subr.mxu0 0.0
    %251 = vmatpush1.msra.mxu0 0.0
    %252 = vmatprep.subr.mxu0 0.0
    %253 = vmatpush1.msra.mxu0 0.0
    %254 = vmatprep.subr.mxu0 0.0
    %255 = vmatpush1.msra.mxu0 0.0
    %256 = vmatprep.subr.mxu0 0.0
    %257 = vmatpush1.msra.mxu0 0.0
    %258 = vmatprep.subr.mxu0 0.0
    %259 = vmatpush1.msra.mxu0 0.0
    %260 = vmatprep.mubr.f32.mxu0 0.0
    %261 = vmatmul.mubr.f32.gmra.mrb[0].mxu0 %v173
    %v262 = vpop.f32.mrb[0].mxu0
    %v263 = vadd.f32 0.0, %v262
    %v264 = vpop.f32.mrb[0].mxu0
    %265 = vmatprep.mubr.f32.mxu0 0.0
    %266 = vmatmul.mubr.f32.gmra.mrb[0].mxu0 %v176
    %v267 = vpop.f32.mrb[0].mxu0
    %v268 = vadd.f32 0.0, %v267
    %v269 = vpop.f32.mrb[0].mxu0
    %270 = vmatprep.mubr.f32.mxu0 0.0
    %271 = vmatmul.mubr.f32.gmra.mrb[0].mxu0 %v179
    %v272 = vpop.f32.mrb[0].mxu0
    %v273 = vadd.f32 0.0, %v272
    %v274 = vpop.f32.mrb[0].mxu0
    %275 = vmatprep.mubr.f32.mxu0 0.0
    %276 = vmatmul.mubr.f32.gmra.mrb[0].mxu0 %v182
    %v277 = vpop.f32.mrb[0].mxu0
    %v278 = vadd.f32 0.0, %v277
    %v279 = vpop.f32.mrb[0].mxu0
    %280 = vmatprep.mubr.f32.mxu0 0.0
    %281 = vmatmul.mubr.f32.gmra.mrb[0].mxu0 %v185
    %v282 = vpop.f32.mrb[0].mxu0
    %v283 = vadd.f32 0.0, %v282
    %v284 = vpop.f32.mrb[0].mxu0
    %285 = vmatprep.mubr.f32.mxu0 0.0
    %286 = vmatmul.mubr.f32.gmra.mrb[0].mxu0 %v188
    %v287 = vpop.f32.mrb[0].mxu0
    %v288 = vadd.f32 0.0, %v287
    %v289 = vpop.f32.mrb[0].mxu0
    %290 = vmatprep.mubr.f32.mxu0 0.0
    %291 = vmatmul.mubr.f32.gmra.mrb[0].mxu0 %v191
    %v292 = vpop.f32.mrb[0].mxu0
    %v293 = vadd.f32 0.0, %v292
    %v294 = vpop.f32.mrb[0].mxu0
    %295 = vmatprep.mubr.f32.mxu0 0.0
    %296 = vmatmul.mubr.f32.gmra.mrb[0].mxu0 %v194
    %v297 = vpop.f32.mrb[0].mxu0
    %v298 = vadd.f32 0.0, %v297
    %v299 = vpop.f32.mrb[0].mxu0
    %300 = vdwg.mxu0
    %v301 = vadd.f32 %v263, %v157
    %v302 = vadd.f32 %v268, %v157
    %v303 = vadd.f32 %v273, %v157
    %v304 = vadd.f32 %v278, %v157
    %v305 = vadd.f32 %v283, %v157
    %v306 = vadd.f32 %v288, %v157
    %v307 = vadd.f32 %v293, %v157
    %v308 = vadd.f32 %v298, %v157
    %v309 = vtanh.pop %v301
    %v310 = vtanh.pop %v302
    %v311 = vtanh.pop %v303
    %v312 = vtanh.pop %v304
    %v313 = vtanh.pop %v305
    %v314 = vtanh.pop %v306
    %v315 = vtanh.pop %v307
    %v316 = vtanh.pop %v308
    %v317 = vsel %vm86, %v309, 0.0
    %318 = vadd.xlane.f32.xlu0 %v317
    %v319 = vpop.xlane.xlu0 %318
    %v320 = vsel %vm86, %v310, 0.0
    %321 = vadd.xlane.f32.xlu0 %v320
    %v322 = vpop.xlane.xlu0 %321
    %v323 = vsel %vm86, %v311, 0.0
    %324 = vadd.xlane.f32.xlu0 %v323
    %v325 = vpop.xlane.xlu0 %324
    %v326 = vsel %vm86, %v312, 0.0
    %327 = vadd.xlane.f32.xlu0 %v326
    %v328 = vpop.xlane.xlu0 %327
    %v329 = vsel %vm86, %v313, 0.0
    %330 = vadd.xlane.f32.xlu0 %v329
    %v331 = vpop.xlane.xlu0 %330
    %v332 = vsel %vm86, %v314, 0.0
    %333 = vadd.xlane.f32.xlu0 %v332
    %v334 = vpop.xlane.xlu0 %333
    %v335 = vsel %vm86, %v315, 0.0
    %336 = vadd.xlane.f32.xlu0 %v335
    %v337 = vpop.xlane.xlu0 %336
    %v338 = vsel %vm86, %v316, 0.0
    %339 = vadd.xlane.f32.xlu0 %v338
    %v340 = vpop.xlane.xlu0 %339
    %v349 = vlaneseq
    %v350 = vand.u32 %v349, 127
    %v351 = vlaneseq
    %v352 = vshrl.u32 %v351, 7
    %v353 = vsub.s32 %v350, %v352
    %v354 = vrot.slane %v319, %v353
    %v355 = vlaneseq
    %v356 = vshrl.u32 %v355, 7
    %v357 = vsub.s32 %v350, %v356
    %v358 = vrot.slane %v322, %v357
    %v359 = vlaneseq
    %v360 = vshrl.u32 %v359, 7
    %v361 = vsub.s32 %v350, %v360
    %v362 = vrot.slane %v325, %v361
    %v363 = vlaneseq
    %v364 = vshrl.u32 %v363, 7
    %v365 = vsub.s32 %v350, %v364
    %v366 = vrot.slane %v328, %v365
    %v367 = vlaneseq
    %v368 = vshrl.u32 %v367, 7
    %v369 = vsub.s32 %v350, %v368
    %v370 = vrot.slane %v331, %v369
    %v371 = vlaneseq
    %v372 = vshrl.u32 %v371, 7
    %v373 = vsub.s32 %v350, %v372
    %v374 = vrot.slane %v334, %v373
    %v375 = vlaneseq
    %v376 = vshrl.u32 %v375, 7
    %v377 = vsub.s32 %v350, %v376
    %v378 = vrot.slane %v337, %v377
    %v379 = vlaneseq
    %v380 = vshrl.u32 %v379, 7
    %v381 = vsub.s32 %v350, %v380
    %v382 = vrot.slane %v340, %v381
    %vm383 = vcmask 1041409
    %v384 = vsel %vm383, %v358, %v354
    %vm385 = vcmask 1042434
    %v386 = vsel %vm385, %v362, %v384
    %vm387 = vcmask 1043459
    %v388 = vsel %vm387, %v366, %v386
    %vm389 = vcmask 1044484
    %v390 = vsel %vm389, %v370, %v388
    %vm391 = vcmask 1045509
    %v392 = vsel %vm391, %v374, %v390
    %vm393 = vcmask 1046534
    %v394 = vsel %vm393, %v378, %v392
    %vm395 = vcmask 1047559
    %v396 = vsel %vm395, %v382, %v394
    %vm398 = vcmask 64512
    %399 = vst.msk [vmem:[#allocation2] sm:$0xff] %vm398, %v396
    %v400 = vld [vmem:[#allocation2] sm:$0xff]
    %401 = vxpose.xlu0.b32.start [1/16] %v400, 128
    %402 = vxpose.xlu0.b32.cont [2/16] 0.0, 128
    %403 = vxpose.xlu0.b32.cont [3/16] 0.0, 128
    %404 = vxpose.xlu0.b32.cont [4/16] 0.0, 128
    %405 = vxpose.xlu0.b32.cont [5/16] 0.0, 128
    %406 = vxpose.xlu0.b32.cont [6/16] 0.0, 128
    %407 = vxpose.xlu0.b32.cont [7/16] 0.0, 128
    %408 = vxpose.xlu0.b32.cont [8/16] 0.0, 128
    %409 = vxpose.xlu0.b32.cont [9/16] 0.0, 128
    %410 = vxpose.xlu0.b32.cont [10/16] 0.0, 128
    %411 = vxpose.xlu0.b32.cont [11/16] 0.0, 128
    %412 = vxpose.xlu0.b32.cont [12/16] 0.0, 128
    %413 = vxpose.xlu0.b32.cont [13/16] 0.0, 128
    %414 = vxpose.xlu0.b32.cont [14/16] 0.0, 128
    %415 = vxpose.xlu0.b32.cont [15/16] 0.0, 128
    %416 = vxpose.xlu0.b32.end [16/16] 0.0, 128
    %v417 = vpop.trf.xlu0
    %v418 = vpop.trf.xlu0
    %v419 = vpop.trf.xlu0
    %v420 = vpop.trf.xlu0
    %v421 = vpop.trf.xlu0
    %v422 = vpop.trf.xlu0
    %v423 = vpop.trf.xlu0
    %v424 = vpop.trf.xlu0
    %v425 = vpop.trf.xlu0
    %v426 = vpop.trf.xlu0
    %v427 = vpop.trf.xlu0
    %v428 = vpop.trf.xlu0
    %v429 = vpop.trf.xlu0
    %v430 = vpop.trf.xlu0
    %v431 = vpop.trf.xlu0
    %v432 = vpop.trf.xlu0
    %v433 = vsel %vm398, %v417, -inf
    %434 = vmax.xlane.f32.xlu0 %v433
    %v435 = vpop.xlane.xlu0 %434
    %v436 = vsub.f32 %v417, %v435
    %v437 = vmul.f32 %v436, 1.442695
    %v438 = vpow.pop %v437
    %v439 = vsel %vm398, %v438, 0.0
    %440 = vadd.xlane.f32.xlu0 %v439
    %v441 = vpop.xlane.xlu0 %440
    %v442 = vrcp.pop %v441
    %v443 = vmul.f32 %v438, %v442
    %444 = vst.msk [vmem:[#allocation11] sm:$0xff] %vm398, %v443
    // Predicated region
    $region38: #{tpu_custom_call.1} parent=1 // pred_check
      _
    $region39: #{tpu_custom_call.1} parent=1 // pred_check_branch
      %446 = sbr.rel (0) target = $region41
    $region40: #{tpu_custom_call.1} parent=1 // pred_region
      %s448 = ssub.s32 128, 128
      %449 = vsyncadd [#allocation5], %s448
      %s451 = sshll.u32 [#allocation11], 4
      %s452 = int_to_ptr.vmem [resolvable:$true] %s451
      %454 = dma.vmem_to_hbm [thread:$0]  %s452, 128, %s5, [#allocation5]
    $region41: #{tpu_custom_call.1} parent=1 // pred_fallthru
      _
    // Predicated region
    $region42: #{tpu_custom_call.1} parent=1 // pred_check
      _
    $region43: #{tpu_custom_call.1} parent=1 // pred_check_branch
      %456 = sbr.rel (0) target = $region45
    $region44: #{tpu_custom_call.1} parent=1 // pred_region
      %457 = dma.done [#allocation5], 128
    $region45: #{tpu_custom_call.1} parent=1 // pred_fallthru
      _
    %458 = vsyncpa [#allocation4], 1
    %459 = vsyncpa [#allocation7], 1
    %460 = vsyncpa [#allocation10], 1
    %461 = vsyncpa [#allocation5], 1

</llo_original>
